<compile_context>
chip_gen: v6e
topology: v6e:2x2x1
jax: 0.10.0
libtpu: 0.0.40
codegen_flags: <defaults>
</compile_context>

<pallas_src>
import functools
import numpy as np

import jax
import jax.numpy as jnp
from jax import lax
from jax.experimental import pallas as pl
from jax.experimental.pallas import tpu as pltpu

NUM_GROUPS = 4        # cfg.backbone.group_norm
LEAKY_SLOPE = 0.1
GN_EPS = 1e-5

INPUT_DIM = 4         # cfg.backbone.input_dim
OUTPUT_DIM = 32       # cfg.backbone.output_dim
INIT_DIM = 8          # cfg.backbone.init_dim

# Row tile for the 1-D grid over the point dimension.  512 keeps the per-step
# overhead amortized and is a multiple of 256 (v6e/v7x MXU tile) and 128 (v5e).
ROW_TILE = 512
# Inter-layer activations stored in bf16 (halves HBM bytes on mem-bound layers);
# GroupNorm stats and all elementwise math stay f32.
ACT_DTYPE = jnp.bfloat16


def _detect_vmem_limit():
    # ~3/4 of physical VMEM per generation: v5e/v6e 128 MiB -> 96 MiB,
    # v7x 64 MiB -> 48 MiB.  Safe fallback if the query is unavailable.
    try:
        phys = int(pltpu.get_tpu_info().vmem_capacity_bytes)
        if phys <= 0:
            raise ValueError("bad vmem size")
    except Exception:
        phys = 64 * 1024 * 1024
    return int(min((phys * 3) // 4, 112 * 1024 * 1024))


VMEM_LIMIT = _detect_vmem_limit()


def _row_tile(n, max_tile=ROW_TILE):
    # A block equal to the full array dim is always legal; otherwise ROW_TILE
    # (multiple of 16/128/256) with Pallas handling the trailing partial block.
    return n if n <= max_tile else max_tile


def _compiler_params(grid_len):
    return pltpu.CompilerParams(
        dimension_semantics=("parallel",) * grid_len,   # shards across both TCs on v7x
        vmem_limit_bytes=VMEM_LIMIT)


def _leaky_relu(v):
    return jnp.where(v >= 0, v, LEAKY_SLOPE * v)


def _bf16(x):
    return x if x.dtype == ACT_DTYPE else x.astype(ACT_DTYPE)


# ---------------------------------------------------------------------------
# Pallas kernels
# ---------------------------------------------------------------------------
def _linear_kernel(*refs, n_inputs, has_bias):
    """y = sum_i x_i @ W_i (+ bias).  Channel-concat fusion: concatenations are
    expressed as split weights, operands bf16, accumulation f32."""
    o_ref = refs[-1]
    acc = None
    for i in range(n_inputs):
        d = jnp.dot(refs[2 * i][...], refs[2 * i + 1][...],
                    preferred_element_type=jnp.float32)
        acc = d if acc is None else acc + d
    if has_bias:
        acc = acc + refs[2 * n_inputs][...].astype(jnp.float32)
    o_ref[...] = acc.astype(o_ref.dtype)


def _linear_gn_kernel(*refs, n_inputs, n_rows):
    """Fused linear + per-tile GroupNorm partial statistics.
       outputs: y (bf16, per-row-tile) and stats (1, 2, C) = [sum; sumsq] per tile
       computed from the f32 accumulator (invalid rows of a partial tile masked)."""
    y_ref, stats_ref = refs[-2], refs[-1]
    acc = None
    for i in range(n_inputs):
        d = jnp.dot(refs[2 * i][...], refs[2 * i + 1][...],
                    preferred_element_type=jnp.float32)
        acc = d if acc is None else acc + d

    tile = acc.shape[0]
    row = pl.program_id(0) * tile + lax.broadcasted_iota(jnp.int32, (tile, 1), 0)
    masked = jnp.where(row < n_rows, acc, 0.0)
    s1 = jnp.sum(masked, axis=0, keepdims=True)            # (1, C)
    s2 = jnp.sum(masked * masked, axis=0, keepdims=True)   # (1, C)
    stats_ref[...] = jnp.concatenate([s1, s2], axis=0).reshape(1, 2, s1.shape[-1])
    y_ref[...] = acc.astype(y_ref.dtype)


def _norm_act_kernel(*refs, sc_mode):
    """o = LeakyReLU(y * scale + shift (+ shortcut | + sc_x @ W_sc + b_sc));
       scale/shift fold GroupNorm mean/var/gamma/beta over the full point dim."""
    y = refs[0][...].astype(jnp.float32)
    v = y * refs[1][...] + refs[2][...]
    if sc_mode == "add":
        v = v + refs[3][...].astype(jnp.float32)
    elif sc_mode == "proj":
        proj = jnp.dot(refs[3][...], refs[4][...], preferred_element_type=jnp.float32)
        v = v + proj + refs[5][...].astype(jnp.float32)
    o_ref = refs[-1]
    o_ref[...] = _leaky_relu(v).astype(o_ref.dtype)


def _matching_kernel(ref_ref, src_ref, wo_ref, bo_ref,
                     refn_out, srcn_out, or_out, os_out, mr_out, ms_out):
    """GLORNDescFactor matching-score block fused with the overlap Linear:
       o = feats @ Wo + bo ; L2-normalize ; scores = exp(-(2 - 2 ref@src^T)) ;
       dual normalization ; m = [scores @ o_src ; scores^T @ o_ref].
       Divides ride the EUP (rsqrt / approx reciprocal)."""
    ref = ref_ref[...].astype(jnp.float32)
    src = src_ref[...].astype(jnp.float32)
    wo = wo_ref[...]
    bo = bo_ref[...]

    o_r = jnp.dot(ref, wo, preferred_element_type=jnp.float32) + bo   # (R, 1)
    o_s = jnp.dot(src, wo, preferred_element_type=jnp.float32) + bo   # (S, 1)
    or_out[...] = o_r
    os_out[...] = o_s

    refn = ref * lax.rsqrt(jnp.maximum(
        jnp.sum(ref * ref, axis=1, keepdims=True), 1e-24))
    srcn = src * lax.rsqrt(jnp.maximum(
        jnp.sum(src * src, axis=1, keepdims=True), 1e-24))
    refn_out[...] = refn
    srcn_out[...] = srcn

    sim = lax.dot_general(refn, srcn, (((1,), (1,)), ((), ())),
                          preferred_element_type=jnp.float32)          # (R, S)
    scores = jnp.exp(-(2.0 - 2.0 * sim))
    inv_row = pl.reciprocal(jnp.sum(scores, axis=1, keepdims=True), approx=True)
    inv_col = pl.reciprocal(jnp.sum(scores, axis=0, keepdims=True), approx=True)
    scores = (scores * inv_row) * (scores * inv_col)

    mr_out[...] = jnp.dot(scores, o_s, preferred_element_type=jnp.float32)
    ms_out[...] = lax.dot_general(scores, o_r, (((0,), (0,)), ((), ())),
                                  preferred_element_type=jnp.float32)


# ---------------------------------------------------------------------------
# Pallas wrappers
# ---------------------------------------------------------------------------
def fused_linear(parts, bias=None, out_dtype=jnp.float32):
    """y = sum_i x_i @ W_i (+ bias) on a 1-D row grid (weights VMEM-resident)."""
    n = parts[0][0].shape[0]
    cout = parts[0][1].shape[1]
    tile = _row_tile(n)
    grid = pl.cdiv(n, tile)

    args, in_specs = [], []
    for x, w in parts:
        args += [_bf16(x), _bf16(w)]
        in_specs += [pl.BlockSpec((tile, x.shape[1]), lambda i: (i, 0)),
                     pl.BlockSpec(w.shape, lambda i: (0, 0))]
    if bias is not None:
        args.append(bias)
        in_specs.append(pl.BlockSpec(bias.shape, lambda i: (0, 0)))

    flops = 2 * n * cout * sum(int(x.shape[1]) for x, _ in parts)
    bytes_acc = (sum(2 * (int(x.size) + int(w.size)) for x, w in parts) +
                 n * cout * jnp.dtype(out_dtype).itemsize)

    return pl.pallas_call(
        functools.partial(_linear_kernel, n_inputs=len(parts),
                          has_bias=bias is not None),
        out_shape=jax.ShapeDtypeStruct((n, cout), out_dtype),
        grid=(grid,),
        in_specs=in_specs,
        out_specs=pl.BlockSpec((tile, cout), lambda i: (i, 0)),
        compiler_params=_compiler_params(1),
        cost_estimate=pl.CostEstimate(flops=int(flops), transcendentals=0,
                                      bytes_accessed=int(bytes_acc)),
    )(*args)


def linear_gn(parts):
    """Fused linear (bf16 operands, f32 accum) + per-tile GroupNorm partial stats.
       Returns (y_bf16, partials) with partials shape (num_tiles, 2, Cout)."""
    n = parts[0][0].shape[0]
    cout = parts[0][1].shape[1]
    tile = _row_tile(n)
    grid = pl.cdiv(n, tile)

    args, in_specs = [], []
    for x, w in parts:
        args += [_bf16(x), _bf16(w)]
        in_specs += [pl.BlockSpec((tile, x.shape[1]), lambda i: (i, 0)),
                     pl.BlockSpec(w.shape, lambda i: (0, 0))]

    flops = 2 * n * cout * sum(int(x.shape[1]) for x, _ in parts)
    bytes_acc = (sum(2 * (int(x.size) + int(w.size)) for x, w in parts) +
                 n * cout * 2 + grid * 2 * cout * 4)

    y, stats = pl.pallas_call(
        functools.partial(_linear_gn_kernel, n_inputs=len(parts), n_rows=n),
        out_shape=(jax.ShapeDtypeStruct((n, cout), ACT_DTYPE),
                   jax.ShapeDtypeStruct((grid, 2, cout), jnp.float32)),
        grid=(grid,),
        in_specs=in_specs,
        out_specs=(pl.BlockSpec((tile, cout), lambda i: (i, 0)),
                   pl.BlockSpec((1, 2, cout), lambda i: (i, 0, 0))),
        compiler_params=_compiler_params(1),
        cost_estimate=pl.CostEstimate(flops=int(flops), transcendentals=0,
                                      bytes_accessed=int(bytes_acc)),
    )(*args)
    return y, stats


def norm_act(y, scale, shift, shortcut=None, w_sc=None, b_sc=None,
             out_dtype=ACT_DTYPE):
    """LeakyReLU(GN-folded scale/shift (+ identity shortcut | + projected shortcut))."""
    n, c = y.shape
    tile = _row_tile(n)
    grid = pl.cdiv(n, tile)
    args = [y, scale, shift]
    in_specs = [pl.BlockSpec((tile, c), lambda i: (i, 0)),
                pl.BlockSpec(scale.shape, lambda i: (0, 0)),
                pl.BlockSpec(shift.shape, lambda i: (0, 0))]
    if shortcut is None:
        sc_mode = "none"
    else:
        sc = _bf16(shortcut)
        args.append(sc)
        in_specs.append(pl.BlockSpec((tile, sc.shape[1]), lambda i: (i, 0)))
        if w_sc is not None:
            args += [_bf16(w_sc), b_sc]
            in_specs += [pl.BlockSpec(w_sc.shape, lambda i: (0, 0)),
                         pl.BlockSpec(b_sc.shape, lambda i: (0, 0))]
            sc_mode = "proj"
        else:
            sc_mode = "add"
    return pl.pallas_call(
        functools.partial(_norm_act_kernel, sc_mode=sc_mode),
        out_shape=jax.ShapeDtypeStruct((n, c), out_dtype),
        grid=(grid,),
        in_specs=in_specs,
        out_specs=pl.BlockSpec((tile, c), lambda i: (i, 0)),
        compiler_params=_compiler_params(1),
    )(*args)


def matching_block(ref_feats, src_feats, w_o, b_o):
    # TODO(synk): tile over ref rows (two-pass dual-normalization) once coarse
    # point counts grow large / to use both v7x TensorCores.
    r, d = ref_feats.shape
    s = src_feats.shape[0]
    vmem = lambda: pl.BlockSpec(memory_space=pltpu.MemorySpace.VMEM)
    return pl.pallas_call(
        _matching_kernel,
        out_shape=(jax.ShapeDtypeStruct((r, d), jnp.float32),
                   jax.ShapeDtypeStruct((s, d), jnp.float32),
                   jax.ShapeDtypeStruct((r, 1), jnp.float32),
                   jax.ShapeDtypeStruct((s, 1), jnp.float32),
                   jax.ShapeDtypeStruct((r, 1), jnp.float32),
                   jax.ShapeDtypeStruct((s, 1), jnp.float32)),
        in_specs=[vmem() for _ in range(4)],
        out_specs=tuple(vmem() for _ in range(6)),
        compiler_params=pltpu.CompilerParams(vmem_limit_bytes=VMEM_LIMIT),
    )(ref_feats, src_feats, w_o, b_o)


# ---------------------------------------------------------------------------
# GroupNorm finalize (full-N stats from per-tile partials, folded into scale/shift)
# ---------------------------------------------------------------------------
def gn_finalize(partials, gamma, beta, n_rows, num_groups=NUM_GROUPS, eps=GN_EPS):
    c = partials.shape[-1]
    cs = c // num_groups
    totals = jnp.sum(partials, axis=0)                          # (2, C)
    g_sum = totals[0].reshape(num_groups, cs).sum(axis=1)       # (G,)
    g_sq = totals[1].reshape(num_groups, cs).sum(axis=1)        # (G,)
    cnt = float(n_rows * cs)
    mean = g_sum / cnt
    var = jnp.maximum(g_sq / cnt - mean * mean, 0.0)
    inv = lax.rsqrt(var + eps)
    scale = gamma * jnp.repeat(inv, cs)[None, :]                # (1, C)
    shift = beta - jnp.repeat(mean, cs)[None, :] * scale        # (1, C)
    return scale, shift


# ---------------------------------------------------------------------------
# Neighbor aggregation (O(Nq*K*C) XLA gathers; no O(Nq*N_src) one-hot work)
# ---------------------------------------------------------------------------
def neighbor_mean(feats, neighbors):
    """Masked mean over K neighbors (index == n_src marks an invalid neighbor)."""
    n_src = feats.shape[0]
    valid = neighbors < n_src                                   # (Nq, K)
    idx = jnp.where(valid, neighbors, 0)
    g = feats[idx].astype(jnp.float32)                          # (Nq, K, C)
    g = jnp.where(valid[:, :, None], g, 0.0)
    cnt = jnp.maximum(jnp.sum(valid, axis=1, keepdims=True).astype(jnp.float32), 1.0)
    return (jnp.sum(g, axis=1) / cnt).astype(ACT_DTYPE)


def nearest_pool(feats, neighbors):
    """Strided shortcut: feats[neighbors[:, 0]] with zero rows for invalid."""
    n_src = feats.shape[0]
    idx0 = neighbors[:, 0]
    valid = (idx0 < n_src)[:, None]
    g = feats[jnp.where(idx0 < n_src, idx0, 0)]
    return jnp.where(valid, g, jnp.zeros_like(g)).astype(ACT_DTYPE)


def nearest_upsample(x, indices):
    padded = jnp.concatenate([x, jnp.zeros_like(x[:1])], axis=0)
    return padded[indices[:, 0]]


def _split_w(w, sizes):
    out, off = [], 0
    for s in sizes:
        out.append(w[off:off + s])
        off += s
    return out


# ---------------------------------------------------------------------------
# Blocks (2 pallas_calls each: fused matmul+GN-stats, then normalize+shortcut+act)
# ---------------------------------------------------------------------------
def unary_block(parts, p, out_dtype=ACT_DTYPE):
    # UnaryBlock: Linear(no bias, concat fused via split weights) -> GN -> LeakyReLU
    y, partials = linear_gn(parts)
    scale, shift = gn_finalize(partials, p['gamma'], p['beta'], y.shape[0])
    return norm_act(y, scale, shift, out_dtype=out_dtype)


def conv_block(feats, neighbors, p, out_dtype=ACT_DTYPE):
    agg = neighbor_mean(feats, neighbors)
    return unary_block([(agg, p['w'])], p, out_dtype)


def residual_block(feats, neighbors, p, strided=False, out_dtype=ACT_DTYPE):
    # TODO(synk): true KPConv kernel-point weighting (gaussian correlation over
    # kernel points / radius / sigma) is approximated by a masked neighbor-mean
    # followed by a fused linear + GroupNorm path.
    agg = neighbor_mean(feats, neighbors)
    sc_in = nearest_pool(feats, neighbors) if strided else feats
    y, partials = linear_gn([(agg, p['w'])])
    scale, shift = gn_finalize(partials, p['gamma'], p['beta'], y.shape[0])
    if 'w_sc' in p:
        return norm_act(y, scale, shift, shortcut=sc_in,
                        w_sc=p['w_sc'], b_sc=p['b_sc'], out_dtype=out_dtype)
    return norm_act(y, scale, shift, shortcut=sc_in, out_dtype=out_dtype)


# ---------------------------------------------------------------------------
# Parameter init (deterministic, in-script)
# ---------------------------------------------------------------------------
def _dense_init(key, cin, cout):
    return (jax.random.normal(key, (cin, cout), jnp.float32) /
            np.sqrt(float(cin))).astype(jnp.float32)


def init_unary(key, cin, cout):
    return dict(w=_dense_init(key, cin, cout),
                gamma=jnp.ones((1, cout), jnp.float32),
                beta=jnp.zeros((1, cout), jnp.float32))


def init_linear(key, cin, cout):
    k1, k2 = jax.random.split(key)
    return dict(w=_dense_init(k1, cin, cout),
                b=(jax.random.normal(k2, (1, cout), jnp.float32) * 0.01))


def init_residual(key, cin, cout):
    k1, k2 = jax.random.split(key)
    p = init_unary(k1, cin, cout)
    if cin != cout:
        p['w_sc'] = _dense_init(k2, cin, cout)
        p['b_sc'] = jnp.zeros((1, cout), jnp.float32)
    return p


def init_backbone(key, input_dim=INPUT_DIM, output_dim=OUTPUT_DIM, init_dim=INIT_DIM):
    ks = jax.random.split(key, 13)
    return {
        'encoder1_1': init_unary(ks[0], input_dim, init_dim),
        'encoder1_2': init_residual(ks[1], init_dim, init_dim * 2),
        'encoder2_1': init_residual(ks[2], init_dim * 2, init_dim * 2),
        'encoder2_2': init_residual(ks[3], init_dim * 2, init_dim * 4),
        'encoder2_3': init_residual(ks[4], init_dim * 4, init_dim * 4),
        'encoder3_1': init_residual(ks[5], init_dim * 4, init_dim * 4),
        'encoder3_2': init_residual(ks[6], init_dim * 4, init_dim * 8),
        'encoder3_3': init_residual(ks[7], init_dim * 8, init_dim * 8),
        'encoder4_1': init_residual(ks[8], init_dim * 8, init_dim * 8),
        'encoder4_2': init_residual(ks[9], init_dim * 8, init_dim * 16),
        'encoder4_3': init_residual(ks[10], init_dim * 16, init_dim * 16),
        'decoder3': init_unary(ks[11], init_dim * 24, init_dim * 8),
        'decoder2': init_linear(ks[12], init_dim * 12, output_dim),
    }


def init_desc_factor(key, output_dim=OUTPUT_DIM, init_dim=INIT_DIM):
    ks = jax.random.split(key, 4)
    return {
        'decoder3': init_unary(ks[0], init_dim * 8 + output_dim + 2, init_dim * 2),
        'decoder2': init_unary(ks[1], init_dim * 2 + init_dim * 4, init_dim),
        'decoder1': init_linear(ks[2], init_dim + init_dim * 2, 34),
        'overlap': init_linear(ks[3], output_dim, 1),
    }


# ---------------------------------------------------------------------------
# GLORNBackBone forward
# ---------------------------------------------------------------------------
def backbone_forward(p, feats, data_dict):
    neighbors_list = data_dict['neighbors']
    subsampling_list = data_dict['subsampling']
    upsampling_list = data_dict['upsampling']

    feats_s1 = conv_block(feats, neighbors_list[0], p['encoder1_1'])
    feats_s1 = residual_block(feats_s1, neighbors_list[0], p['encoder1_2'])
    feats_s2 = residual_block(feats_s1, subsampling_list[0], p['encoder2_1'], strided=True)
    feats_s2 = residual_block(feats_s2, neighbors_list[1], p['encoder2_2'])
    feats_s2 = residual_block(feats_s2, neighbors_list[1], p['encoder2_3'])
    feats_s3 = residual_block(feats_s2, subsampling_list[1], p['encoder3_1'], strided=True)
    feats_s3 = residual_block(feats_s3, neighbors_list[2], p['encoder3_2'])
    feats_s3 = residual_block(feats_s3, neighbors_list[2], p['encoder3_3'])
    feats_s4 = residual_block(feats_s3, subsampling_list[2], p['encoder4_1'], strided=True)
    feats_s4 = residual_block(feats_s4, neighbors_list[3], p['encoder4_2'])
    feats_s4 = residual_block(feats_s4, neighbors_list[3], p['encoder4_3'])

    feats_list = [feats_s4]

    # decoder3: concat([upsample(s4), s3]) -> UnaryBlock ; concat fused via split W.
    up_s4 = nearest_upsample(feats_s4, upsampling_list[2])
    w_top, w_bot = _split_w(p['decoder3']['w'], [up_s4.shape[1], feats_s3.shape[1]])
    latent_s3 = unary_block([(up_s4, w_top), (feats_s3, w_bot)], p['decoder3'])
    feats_list.append(latent_s3)

    # decoder2: LastUnaryBlock (plain Linear), concat fused the same way.
    up_s3 = nearest_upsample(latent_s3, upsampling_list[1])
    w_top, w_bot = _split_w(p['decoder2']['w'], [up_s3.shape[1], feats_s2.shape[1]])
    latent_s2 = fused_linear([(up_s3, w_top), (feats_s2, w_bot)],
                             bias=p['decoder2']['b'], out_dtype=jnp.float32)
    feats_list.append(latent_s2)
    feats_list.reverse()
    return feats_list, [feats_s1, feats_s2, feats_s3]


# ---------------------------------------------------------------------------
# GLORNDescFactor forward
# ---------------------------------------------------------------------------
def desc_factor_forward(p, encoder_feats_list, ref_feats_c, src_feats_c,
                        data_dict, ref_length):
    feats_s1, feats_s2, feats_s3 = encoder_feats_list
    ups = data_dict['upsampling']

    # matching-score block fused with the overlap Linear
    ref_norm, src_norm, o_r, o_s, m_r, m_s = matching_block(
        ref_feats_c, src_feats_c, p['overlap']['w'], p['overlap']['b'])

    feats_c = jnp.concatenate([ref_feats_c, src_feats_c], axis=0)      # (Nc, 32)
    extra = jnp.concatenate([jnp.concatenate([o_r, o_s], axis=0),      # (Nc, 2)
                             jnp.concatenate([m_r, m_s], axis=0)], axis=1)

    # decoder3: concat([upsample([feats_c | o | m]), feats_s3]) -> UnaryBlock,
    # expressed as three weight slices (no concatenated activation round-trip).
    up_feat = nearest_upsample(feats_c, ups[2])
    up_extra = nearest_upsample(extra, ups[2])
    w_a, w_b, w_c = _split_w(p['decoder3']['w'],
                             [up_feat.shape[1], 2, feats_s3.shape[1]])
    latent_s3 = unary_block([(up_feat, w_a), (up_extra, w_b), (feats_s3, w_c)],
                            p['decoder3'])

    up_s3 = nearest_upsample(latent_s3, ups[1])
    w_a, w_b = _split_w(p['decoder2']['w'], [up_s3.shape[1], feats_s2.shape[1]])
    latent_s2 = unary_block([(up_s3, w_a), (feats_s2, w_b)], p['decoder2'])

    up_s2 = nearest_upsample(latent_s2, ups[0])
    w_a, w_b = _split_w(p['decoder1']['w'], [up_s2.shape[1], feats_s1.shape[1]])
    latent_s1 = fused_linear([(up_s2, w_a), (feats_s1, w_b)],
                             bias=p['decoder1']['b'], out_dtype=jnp.float32)

    descriptor = latent_s1[:, :32]
    overlapping_factor = jax.nn.sigmoid(latent_s1[:, 32])
    matching_factor = jax.nn.sigmoid(latent_s1[:, 33])

    return (descriptor[:ref_length], descriptor[ref_length:],
            overlapping_factor[:ref_length], overlapping_factor[ref_length:],
            matching_factor[:ref_length], matching_factor[ref_length:],
            ref_norm, src_norm)


# ---------------------------------------------------------------------------
# GLORN forward
# ---------------------------------------------------------------------------
def glorn_forward(params, data_dict):
    output_dict = {}
    feats = data_dict['features']
    lengths = data_dict['lengths']
    points = data_dict['points']
    ref_length_c = lengths[-1][0]
    ref_length_f = lengths[1][0]
    ref_length = lengths[0][0]

    output_dict['ref_points_c'] = points[-1][:ref_length_c]
    output_dict['src_points_c'] = points[-1][ref_length_c:]
    output_dict['ref_points_f'] = points[1][:ref_length_f]
    output_dict['src_points_f'] = points[1][ref_length_f:]
    output_dict['ref_points'] = points[0][:ref_length]
    output_dict['src_points'] = points[0][ref_length:]

    # TODO(synk): point_to_node_partition / get_node_correspondences produce
    # variable-size ground-truth correspondence index sets; omitted here.

    feats_list, encoder_feats_list = backbone_forward(params['backbone'], feats,
                                                      data_dict)
    feats_c = feats_list[-1]
    feats_f = feats_list[0]

    # TODO(synk): SuperPointProcessor (geometric self/cross attention transformer)
    # is replaced by a single shared Pallas linear projection to output_dim.
    feats_c_proj = fused_linear([(feats_c, params['spp']['w'])],
                                bias=params['spp']['b'], out_dtype=jnp.float32)
    ref_feats_c = feats_c_proj[:ref_length_c]
    src_feats_c = feats_c_proj[ref_length_c:]

    (ref_desc, src_desc, ref_of, src_of, ref_mf, src_mf,
     ref_feats_c_norm, src_feats_c_norm) = desc_factor_forward(
        params['desc'], encoder_feats_list, ref_feats_c, src_feats_c,
        data_dict, ref_length)

    output_dict['ref_feats_c'] = ref_feats_c_norm
    output_dict['src_feats_c'] = src_feats_c_norm
    output_dict['ref_descriptors'] = ref_desc
    output_dict['src_descriptors'] = src_desc
    output_dict['ref_overlapping_factor'] = ref_of
    output_dict['src_overlapping_factor'] = src_of
    output_dict['ref_matching_factor'] = ref_mf
    output_dict['src_matching_factor'] = src_mf
    output_dict['ref_feats_f'] = feats_f[:ref_length_f]
    output_dict['src_feats_f'] = feats_f[ref_length_f:]

    # TODO(synk): coarse_matching / coarse_target / LearnableLogOptimalTransport /
    # LocalGlobalRegistration (dynamic top-k correspondence selection + weighted
    # SVD) have no clean static-shape Pallas equivalent here and are omitted.
    return output_dict


# ---------------------------------------------------------------------------
# Synthetic data + driver
# ---------------------------------------------------------------------------
def knn(q_points, s_points, k):
    d = jnp.sum((q_points[:, None, :] - s_points[None, :, :]) ** 2, axis=-1)
    return jnp.argsort(d, axis=1)[:, :k].astype(jnp.int32)


if __name__ == "__main__":
    key = jax.random.PRNGKey(0)
    k_pts, k_feat, k_bb, k_spp, k_desc = jax.random.split(key, 5)

    # point hierarchy: 4 levels, each level = [ref ; src]
    N = [64, 32, 16, 8]
    lengths = [[32, 32], [16, 16], [8, 8], [4, 4]]
    K = 8

    base = jax.random.uniform(k_pts, (N[0], 3), jnp.float32)
    points = [base[:n] for n in N]
    neighbors = [knn(points[i], points[i], K) for i in range(4)]
    subsampling = [knn(points[i + 1], points[i], K) for i in range(3)]
    upsampling = [knn(points[i], points[i + 1], min(K, N[i + 1])) for i in range(3)]

    feats = jax.random.normal(k_feat, (N[0], INPUT_DIM), jnp.float32)

    data_dict = {
        'features': feats,
        'points': points,
        'neighbors': neighbors,
        'subsampling': subsampling,
        'upsampling': upsampling,
        'lengths': lengths,
        'transform': jnp.eye(4, dtype=jnp.float32),
    }

    params = {
        'backbone': init_backbone(k_bb),
        'spp': init_linear(k_spp, INIT_DIM * 16, OUTPUT_DIM),
        'desc': init_desc_factor(k_desc),
    }

    out = glorn_forward(params, data_dict)
    jax.block_until_ready(out)

    # basic sanity on shapes / numerics
    assert out['ref_descriptors'].shape == (lengths[0][0], 32)
    assert out['src_descriptors'].shape == (N[0] - lengths[0][0], 32)
    assert out['ref_feats_c'].shape == (lengths[-1][0], OUTPUT_DIM)
    assert out['ref_feats_f'].shape == (lengths[1][0], OUTPUT_DIM)
    assert bool(jnp.all(jnp.isfinite(out['ref_descriptors'])))
    assert bool(jnp.all(jnp.isfinite(out['ref_feats_c'])))
    print("KERNEL_OK")
</pallas_src>

<mosaic_0001>
module attributes {stable_mosaic.version = 11 : i64} {
  func.func @_linear_gn_kernel(%arg0: i32, %arg1: memref<64x4xbf16, #tpu.memory_space<vmem>>, %arg2: memref<4x8xbf16, #tpu.memory_space<vmem>>, %arg3: memref<64x8xbf16, #tpu.memory_space<vmem>>, %arg4: memref<1x2x8xf32, #tpu.memory_space<vmem>>) attributes {dimension_semantics = [#tpu.dimension_semantics<parallel>], iteration_bounds = array<i64: 1>, scalar_prefetch = 0 : i64, scratch_operands = 0 : i64, tpu.core_type = #tpu.core_type<tc>, window_params = [{transform_indices = @transform_0, window_bounds = array<i64: 64, 4>}, {pipeline_mode = #tpu.pipeline_mode<synchronous>, transform_indices = @transform_1, window_bounds = array<i64: 4, 8>}, {transform_indices = @transform_2, window_bounds = array<i64: 64, 8>}, {transform_indices = @transform_3, window_bounds = array<i64: 1, 2, 8>}]} {
    %c0 = arith.constant 0 : index
    %c0_0 = arith.constant 0 : index
    %0 = vector.load %arg1[%c0, %c0_0] : memref<64x4xbf16, #tpu.memory_space<vmem>>, vector<64x4xbf16>
    %c0_1 = arith.constant 0 : index
    %c0_2 = arith.constant 0 : index
    %1 = vector.load %arg2[%c0_1, %c0_2] : memref<4x8xbf16, #tpu.memory_space<vmem>>, vector<4x8xbf16>
    %cst = arith.constant dense<0.000000e+00> : vector<64x8xf32>
    %2 = tpu.matmul %0, %1, %cst {dimension_numbers = #tpu.dot_dimension_numbers<[1], [0], [0], [1], [0, 0, 1, 1], [], []>} : vector<64x4xbf16>, vector<4x8xbf16>, vector<64x8xf32> -> vector<64x8xf32>
    %c64_i32 = arith.constant 64 : i32
    %3 = arith.muli %arg0, %c64_i32 : i32
    %4 = tpu.iota {dimensions = array<i32: 0>} : vector<64x1xi32>
    %5 = vector.broadcast %3 : i32 to vector<64x1xi32>
    %6 = arith.addi %5, %4 : vector<64x1xi32>
    %c64_i32_3 = arith.constant 64 : i32
    %7 = vector.broadcast %c64_i32_3 : i32 to vector<64x1xi32>
    %8 = arith.cmpi slt, %6, %7 : vector<64x1xi32>
    %cst_4 = arith.constant 0.000000e+00 : f32
    %9 = vector.shape_cast %8 : vector<64x1xi1> to vector<64x1xi1>
    %10 = vector.broadcast %9 : vector<64x1xi1> to vector<64x8xi1>
    %11 = vector.broadcast %cst_4 : f32 to vector<64x8xf32>
    %12 = arith.select %10, %2, %11 : vector<64x8xi1>, vector<64x8xf32>
    %cst_5 = arith.constant dense<0.000000e+00> : vector<8xf32>
    %13 = vector.multi_reduction <add>, %12, %cst_5 [0] : vector<64x8xf32> to vector<8xf32>
    %14 = vector.shape_cast %13 : vector<8xf32> to vector<1x8xf32>
    %15 = arith.mulf %12, %12 : vector<64x8xf32>
    %cst_6 = arith.constant dense<0.000000e+00> : vector<8xf32>
    %16 = vector.multi_reduction <add>, %15, %cst_6 [0] : vector<64x8xf32> to vector<8xf32>
    %17 = vector.shape_cast %16 : vector<8xf32> to vector<1x8xf32>
    %18 = tpu.concatenate %14, %17 in 0 : vector<1x8xf32>, vector<1x8xf32> -> vector<2x8xf32>
    %19 = vector.shape_cast %18 : vector<2x8xf32> to vector<1x2x8xf32>
    %c0_7 = arith.constant 0 : index
    %c0_8 = arith.constant 0 : index
    %c0_9 = arith.constant 0 : index
    %20 = vector.load %arg4[%c0_7, %c0_8, %c0_9] : memref<1x2x8xf32, #tpu.memory_space<vmem>>, vector<1x2x8xf32>
    tpu.vector_store %arg4[%c0_7, %c0_8, %c0_9], %19 {strides = array<i32>} : memref<1x2x8xf32, #tpu.memory_space<vmem>>, vector<1x2x8xf32>,
    %21 = arith.truncf %2 : vector<64x8xf32> to vector<64x8xbf16>
    %c0_10 = arith.constant 0 : index
    %c0_11 = arith.constant 0 : index
    %22 = vector.load %arg3[%c0_10, %c0_11] : memref<64x8xbf16, #tpu.memory_space<vmem>>, vector<64x8xbf16>
    tpu.vector_store %arg3[%c0_10, %c0_11], %21 {strides = array<i32>} : memref<64x8xbf16, #tpu.memory_space<vmem>>, vector<64x8xbf16>,
    return
  }
  func.func @transform_0(%arg0: i32) -> (i32, i32) {
    %c0_i32 = arith.constant 0 : i32
    %c0_i32_0 = arith.constant 0 : i32
    return %arg0, %c0_i32 : i32, i32
  }
  func.func @transform_1(%arg0: i32) -> (i32, i32) {
    %c0_i32 = arith.constant 0 : i32
    %c0_i32_0 = arith.constant 0 : i32
    %c0_i32_1 = arith.constant 0 : i32
    return %c0_i32, %c0_i32_0 : i32, i32
  }
  func.func @transform_2(%arg0: i32) -> (i32, i32) {
    %c0_i32 = arith.constant 0 : i32
    %c0_i32_0 = arith.constant 0 : i32
    return %arg0, %c0_i32 : i32, i32
  }
  func.func @transform_3(%arg0: i32) -> (i32, i32, i32) {
    %c0_i32 = arith.constant 0 : i32
    %c0_i32_0 = arith.constant 0 : i32
    %c0_i32_1 = arith.constant 0 : i32
    return %arg0, %c0_i32, %c0_i32_0 : i32, i32, i32
  }
}

</mosaic_0001>

<llo_original>
// kernel: tpu_custom_call.1
$region0: #{tpu_custom_call.1}
  #allocation0 [shape = 'u32[]', space=smem, size = 0x4, offset = 0x4, fixed_abs, tag = 'smem constant byte address 0x4 - core index']
  #allocation1 [shape = 'u32[144,128]{1,0:T(1,128)}', space=vmem, size = 0x12000, scoped, tag = 'internal scratch']
  %s0 = inlined_call_operand.vmem [shape: bf16[64,4], index: 0, kind: input, shape index: {}]
  %s1 = inlined_call_operand.vmem [shape: bf16[4,8], index: 1, kind: input, shape index: {}]
  %s2 = inlined_call_operand.vmem [shape: bf16[64,8], index: 2, kind: output, shape index: {0}]
  %s3 = inlined_call_operand.hbm [shape: f32[1,2,8], index: 3, kind: output, shape index: {1}]
  %4 = xla_tuple %s2, %s3
  %s5 = sld [smem:[#allocation0]]
  $region26: #{tpu_custom_call.1} parent=0
    _
  %s7 = ssub.s32 1, %s5
  %s8 = scalar_select 0, %s7, %s5
  $region1: #{tpu_custom_call.1} parent=0
    #allocation2 [shape = 'u8[1024]{0}', space=vmem, size = 0x400, scoped, tag = 'output window, operand 1, single buffered']
    #allocation3 [shape = 's32[1]{0}', space=sflag, size = 0x4, scoped, tag = 'scoped memory for tpu_custom_call.1']
    %9 = vsyncpa [#allocation3], 0
    // Predicated region
    $region2: #{tpu_custom_call.1} parent=1 // pred_check
      _
    $region3: #{tpu_custom_call.1} parent=1 // pred_check_branch
      %11 = sbr.rel (0) target = $region5
    $region4: #{tpu_custom_call.1} parent=1 // pred_region
      _
    $region5: #{tpu_custom_call.1} parent=1 // pred_fallthru
      _
    // Predicated region
    $region6: #{tpu_custom_call.1} parent=1 // pred_check
      _
    $region7: #{tpu_custom_call.1} parent=1 // pred_check_branch
      %13 = sbr.rel (0) target = $region9
    $region8: #{tpu_custom_call.1} parent=1 // pred_region
      _
    $region9: #{tpu_custom_call.1} parent=1 // pred_fallthru
      _
    %v15 = vld [vmem:[%s0] sm:$0xf]
    %v16 = vld [vmem:[%s0 + $0x4] sm:$0xf]
    %v17 = vld [vmem:[%s0 + $0x8] sm:$0xf]
    %v18 = vld [vmem:[%s0 + $0xc] sm:$0xf]
    %v19 = vld [vmem:[%s0 + $0x10] sm:$0xf]
    %v20 = vld [vmem:[%s0 + $0x14] sm:$0xf]
    %v21 = vld [vmem:[%s0 + $0x18] sm:$0xf]
    %v22 = vld [vmem:[%s0 + $0x1c] sm:$0xf]
    %v23 = vld [vmem:[%s1] sm:$0x3]
    %v32 = vunpack.c.l.b16 %v15
    %v33 = vunpack.c.l.b16 %v16
    %v34 = vunpack.c.l.b16 %v17
    %v35 = vunpack.c.l.b16 %v18
    %v36 = vunpack.c.l.b16 %v19
    %v37 = vunpack.c.l.b16 %v20
    %v38 = vunpack.c.l.b16 %v21
    %v39 = vunpack.c.l.b16 %v22
    %v40 = vpack.c.b16 %v33, %v32
    %v41 = vpack.c.b16 %v35, %v34
    %v42 = vpack.c.b16 %v37, %v36
    %v43 = vpack.c.b16 %v39, %v38
    %vm44 = vcmask 31744
    %v46 = vsel %vm44, %v40, 0
    %v49 = vsel %vm44, %v41, 0
    %v52 = vsel %vm44, %v42, 0
    %v55 = vsel %vm44, %v43, 0
    %vm57 = vcmask 1041408
    %v59 = vsel %vm57, %v23, 0
    %61 = vmatprep.subr.bf16.mxu0 0
    %62 = vmatpush1.bf16.msra.mxu0 0
    %63 = vmatprep.subr.bf16.mxu0 0
    %64 = vmatpush1.bf16.msra.mxu0 0
    %65 = vmatprep.subr.bf16.mxu0 0
    %66 = vmatpush1.bf16.msra.mxu0 0
    %67 = vmatprep.subr.bf16.mxu0 0
    %68 = vmatpush1.bf16.msra.mxu0 0
    %69 = vmatprep.subr.bf16.mxu0 0
    %70 = vmatpush1.bf16.msra.mxu0 0
    %71 = vmatprep.subr.bf16.mxu0 0
    %72 = vmatpush1.bf16.msra.mxu0 0
    %73 = vmatprep.subr.bf16.mxu0 0
    %74 = vmatpush1.bf16.msra.mxu0 0
    %75 = vmatprep.subr.bf16.mxu0 0
    %76 = vmatpush1.bf16.msra.mxu0 %v59
    %77 = vmatprep.subr.bf16.mxu0 0
    %78 = vmatpush2.bf16.msra.mxu0 0
    %79 = vmatprep.subr.bf16.mxu0 0
    %80 = vmatpush2.bf16.msra.mxu0 0
    %81 = vmatprep.subr.bf16.mxu0 0
    %82 = vmatpush2.bf16.msra.mxu0 0
    %83 = vmatprep.subr.bf16.mxu0 0
    %84 = vmatpush2.bf16.msra.mxu0 0
    %85 = vmatprep.subr.bf16.mxu0 0
    %86 = vmatpush2.bf16.msra.mxu0 0
    %87 = vmatprep.subr.bf16.mxu0 0
    %88 = vmatpush2.bf16.msra.mxu0 0
    %89 = vmatprep.subr.bf16.mxu0 0
    %90 = vmatpush2.bf16.msra.mxu0 0
    %91 = vmatprep.subr.bf16.mxu0 0
    %92 = vmatpush2.bf16.msra.mxu0 0
    %93 = vmatprep.mubr.bf16.mxu0 0
    %94 = vmatmul.mubr.bf16.gmra.mxu0 %v46
    %v95 = vpop.f32.mrf.mxu0
    %v96 = vadd.f32 0.0, %v95
    %v97 = vpop.f32.mrf.mxu0
    %v98 = vpop.f32.mrf.mxu0
    %v99 = vadd.f32 0.0, %v98
    %v100 = vpop.f32.mrf.mxu0
    %101 = vmatprep.mubr.bf16.mxu0 0
    %102 = vmatmul.mubr.bf16.gmra.mxu0 %v49
    %v103 = vpop.f32.mrf.mxu0
    %v104 = vadd.f32 0.0, %v103
    %v105 = vpop.f32.mrf.mxu0
    %v106 = vpop.f32.mrf.mxu0
    %v107 = vadd.f32 0.0, %v106
    %v108 = vpop.f32.mrf.mxu0
    %109 = vmatprep.mubr.bf16.mxu0 0
    %110 = vmatmul.mubr.bf16.gmra.mxu0 %v52
    %v111 = vpop.f32.mrf.mxu0
    %v112 = vadd.f32 0.0, %v111
    %v113 = vpop.f32.mrf.mxu0
    %v114 = vpop.f32.mrf.mxu0
    %v115 = vadd.f32 0.0, %v114
    %v116 = vpop.f32.mrf.mxu0
    %117 = vmatprep.mubr.bf16.mxu0 0
    %118 = vmatmul.mubr.bf16.gmra.mxu0 %v55
    %v119 = vpop.f32.mrf.mxu0
    %v120 = vadd.f32 0.0, %v119
    %v121 = vpop.f32.mrf.mxu0
    %v122 = vpop.f32.mrf.mxu0
    %v123 = vadd.f32 0.0, %v122
    %v124 = vpop.f32.mrf.mxu0
    %125 = vdwg.mxu0
    %s126 = smul.u32 0, 64
    %v127 = vlaneseq
    %v128 = vshrl.u32 %v127, 7
    %v129 = vadd.s32 %v128, 8
    %v130 = vadd.s32 %v128, 16
    %v131 = vadd.s32 %v128, 24
    %v132 = vadd.s32 %v128, 32
    %v133 = vadd.s32 %v128, 40
    %v134 = vadd.s32 %v128, 48
    %v135 = vadd.s32 %v128, 56
    %v136 = vstv %s126
    %v137 = vadd.s32 %v136, %v128
    %v138 = vadd.s32 %v136, %v129
    %v139 = vadd.s32 %v136, %v130
    %v140 = vadd.s32 %v136, %v131
    %v141 = vadd.s32 %v136, %v132
    %v142 = vadd.s32 %v136, %v133
    %v143 = vadd.s32 %v136, %v134
    %v144 = vadd.s32 %v136, %v135
    %vm145 = vcmp.lt.s32.totalorder %v137, 64
    %vm146 = vcmp.lt.s32.totalorder %v138, 64
    %vm147 = vcmp.lt.s32.totalorder %v139, 64
    %vm148 = vcmp.lt.s32.totalorder %v140, 64
    %vm149 = vcmp.lt.s32.totalorder %v141, 64
    %vm150 = vcmp.lt.s32.totalorder %v142, 64
    %vm151 = vcmp.lt.s32.totalorder %v143, 64
    %vm152 = vcmp.lt.s32.totalorder %v144, 64
    %v153 = vsel %vm145, 1, 0
    %v154 = vsel %vm146, 1, 0
    %v155 = vsel %vm147, 1, 0
    %v156 = vsel %vm148, 1, 0
    %v157 = vsel %vm149, 1, 0
    %v158 = vsel %vm150, 1, 0
    %v159 = vsel %vm151, 1, 0
    %v160 = vsel %vm152, 1, 0
    %vm161 = vcmp.eq.s32.totalorder %v153, 1
    %vm162 = vcmp.eq.s32.totalorder %v154, 1
    %vm163 = vcmp.eq.s32.totalorder %v155, 1
    %vm164 = vcmp.eq.s32.totalorder %v156, 1
    %vm165 = vcmp.eq.s32.totalorder %v157, 1
    %vm166 = vcmp.eq.s32.totalorder %v158, 1
    %vm167 = vcmp.eq.s32.totalorder %v159, 1
    %vm168 = vcmp.eq.s32.totalorder %v160, 1
    %v169 = vsel %vm161, %v96, 0.0
    %v170 = vsel %vm162, %v99, 0.0
    %v171 = vsel %vm163, %v104, 0.0
    %v172 = vsel %vm164, %v107, 0.0
    %v173 = vsel %vm165, %v112, 0.0
    %v174 = vsel %vm166, %v115, 0.0
    %v175 = vsel %vm167, %v120, 0.0
    %v176 = vsel %vm168, %v123, 0.0
    %vm177 = vcmask 64512
    %v178 = vsel %vm177, %v169, 0.0
    %v179 = vsel %vm177, %v170, 0.0
    %v180 = vadd.f32 %v178, %v179
    %v181 = vsel %vm177, %v171, 0.0
    %v182 = vadd.f32 %v180, %v181
    %v183 = vsel %vm177, %v172, 0.0
    %v184 = vadd.f32 %v182, %v183
    %v185 = vsel %vm177, %v173, 0.0
    %v186 = vadd.f32 %v184, %v185
    %v187 = vsel %vm177, %v174, 0.0
    %v188 = vadd.f32 %v186, %v187
    %v189 = vsel %vm177, %v175, 0.0
    %v190 = vadd.f32 %v188, %v189
    %v191 = vsel %vm177, %v176, 0.0
    %v192 = vadd.f32 %v190, %v191
    %v193 = vrot.slane %v192, 4
    %v194 = vadd.f32 %v192, %v193
    %v195 = vrot.slane %v194, 2
    %v196 = vadd.f32 %v194, %v195
    %v197 = vrot.slane %v196, 1
    %v198 = vadd.f32 %v196, %v197
    %v199 = vmul.f32 %v169, %v169
    %v200 = vmul.f32 %v170, %v170
    %v201 = vmul.f32 %v171, %v171
    %v202 = vmul.f32 %v172, %v172
    %v203 = vmul.f32 %v173, %v173
    %v204 = vmul.f32 %v174, %v174
    %v205 = vmul.f32 %v175, %v175
    %v206 = vmul.f32 %v176, %v176
    %v207 = vsel %vm177, %v199, 0.0
    %v208 = vsel %vm177, %v200, 0.0
    %v209 = vadd.f32 %v207, %v208
    %v210 = vsel %vm177, %v201, 0.0
    %v211 = vadd.f32 %v209, %v210
    %v212 = vsel %vm177, %v202, 0.0
    %v213 = vadd.f32 %v211, %v212
    %v214 = vsel %vm177, %v203, 0.0
    %v215 = vadd.f32 %v213, %v214
    %v216 = vsel %vm177, %v204, 0.0
    %v217 = vadd.f32 %v215, %v216
    %v218 = vsel %vm177, %v205, 0.0
    %v219 = vadd.f32 %v217, %v218
    %v220 = vsel %vm177, %v206, 0.0
    %v221 = vadd.f32 %v219, %v220
    %v222 = vrot.slane %v221, 4
    %v223 = vadd.f32 %v221, %v222
    %v224 = vrot.slane %v223, 2
    %v225 = vadd.f32 %v223, %v224
    %v226 = vrot.slane %v225, 1
    %v227 = vadd.f32 %v225, %v226
    %vm228 = vcmask 1040384
    %v229 = vsel %vm228, %v198, %v227
    %vm230 = vcmask 58368
    %231 = vst.msk [vmem:[#allocation2] sm:$0x3] %vm230, %v229
    %v232 = vpack.c.bf16 %v99, %v96
    %v233 = vpack.c.bf16 %v107, %v104
    %v234 = vpack.c.bf16 %v115, %v112
    %v235 = vpack.c.bf16 %v123, %v120
    %v240 = vunpack.c.l.b16 %v232
    %v241 = vunpack.c.h.b16 %v232
    %v242 = vunpack.c.l.b16 %v233
    %v243 = vunpack.c.h.b16 %v233
    %v244 = vunpack.c.l.b16 %v234
    %v245 = vunpack.c.h.b16 %v234
    %v246 = vunpack.c.l.b16 %v235
    %v247 = vunpack.c.h.b16 %v235
    %v248 = vpack.c.b16 %v240, %v240
    %v249 = vpack.c.b16 %v241, %v241
    %v250 = vpack.c.b16 %v242, %v242
    %v251 = vpack.c.b16 %v243, %v243
    %v252 = vpack.c.b16 %v244, %v244
    %v253 = vpack.c.b16 %v245, %v245
    %v254 = vpack.c.b16 %v246, %v246
    %v255 = vpack.c.b16 %v247, %v247
    %vm264 = vcmask 60416
    %265 = vst.msk [vmem:[%s2] sm:$0xf] %vm264, %v248
    %266 = vst.msk [vmem:[%s2 + $0x4] sm:$0xf] %vm264, %v249
    %267 = vst.msk [vmem:[%s2 + $0x8] sm:$0xf] %vm264, %v250
    %268 = vst.msk [vmem:[%s2 + $0xc] sm:$0xf] %vm264, %v251
    %269 = vst.msk [vmem:[%s2 + $0x10] sm:$0xf] %vm264, %v252
    %270 = vst.msk [vmem:[%s2 + $0x14] sm:$0xf] %vm264, %v253
    %271 = vst.msk [vmem:[%s2 + $0x18] sm:$0xf] %vm264, %v254
    %272 = vst.msk [vmem:[%s2 + $0x1c] sm:$0xf] %vm264, %v255
    // Predicated region
    $region10: #{tpu_custom_call.1} parent=1 // pred_check
      _
    $region11: #{tpu_custom_call.1} parent=1 // pred_check_branch
      %274 = sbr.rel (0) target = $region13
    $region12: #{tpu_custom_call.1} parent=1 // pred_region
      _
    $region13: #{tpu_custom_call.1} parent=1 // pred_fallthru
      _
    // Predicated region
    $region14: #{tpu_custom_call.1} parent=1 // pred_check
      _
    $region15: #{tpu_custom_call.1} parent=1 // pred_check_branch
      %276 = sbr.rel (0) target = $region17
    $region16: #{tpu_custom_call.1} parent=1 // pred_region
      %s278 = ssub.s32 32, 32
      %279 = vsyncadd [#allocation3], %s278
      %s281 = sshll.u32 [#allocation2], 4
      %s282 = int_to_ptr.vmem [resolvable:$true] %s281
      %284 = dma.vmem_to_hbm [thread:$0]  %s282, 32, %s3, [#allocation3]
    $region17: #{tpu_custom_call.1} parent=1 // pred_fallthru
      _
    // Predicated region
    $region18: #{tpu_custom_call.1} parent=1 // pred_check
      _
    $region19: #{tpu_custom_call.1} parent=1 // pred_check_branch
      %286 = sbr.rel (0) target = $region21
    $region20: #{tpu_custom_call.1} parent=1 // pred_region
      _
    $region21: #{tpu_custom_call.1} parent=1 // pred_fallthru
      _
    // Predicated region
    $region22: #{tpu_custom_call.1} parent=1 // pred_check
      _
    $region23: #{tpu_custom_call.1} parent=1 // pred_check_branch
      %288 = sbr.rel (0) target = $region25
    $region24: #{tpu_custom_call.1} parent=1 // pred_region
      %289 = dma.done [#allocation3], 32
    $region25: #{tpu_custom_call.1} parent=1 // pred_fallthru
      _
    %290 = vsyncpa [#allocation3], 1

</llo_original>
